<compile_context>
chip_gen: v6e
topology: v6e:2x2x1
jax: 0.10.0
libtpu: 0.0.40
codegen_flags: <defaults>
</compile_context>

<pallas_src>
import jax
import jax.numpy as jnp
from jax import lax
from jax.experimental import pallas as pl
from jax.experimental.pallas import tpu as pltpu


def _round_up(v, m):
    return ((v + m - 1) // m) * m


def mlp_readout_kernel(x_ref, batch_ref, w1_ref, b1_ref, w2_ref, b2_ref,
                       out_ref, pooled_ref, counts_ref):
    i = pl.program_id(0)

    @pl.when(i == 0)
    def _init():
        pooled_ref[...] = jnp.zeros_like(pooled_ref)
        counts_ref[...] = jnp.zeros_like(counts_ref)

    # ---- per-tile front half: fused Linear+BN bias, ReLU (bf16 MXU, f32 acc) ----
    x = x_ref[...]                                                    # [TN, Din] bf16/f32
    h = jnp.dot(x, w1_ref[...], preferred_element_type=jnp.float32)   # [TN, H] f32
    h = jnp.maximum(h + b1_ref[...], 0.0)                             # bias+BN folded, ReLU
    # (Dropout == identity at inference)

    # ---- segment-sum into the resident [G, H] accumulator (pool before W2) ----
    g = pooled_ref.shape[0]
    tn = x.shape[0]
    batch = batch_ref[...]                                            # [1, TN] int32 (lane-dense)
    graph_ids = lax.broadcasted_iota(jnp.int32, (g, tn), 0)           # [G, TN]
    onehot = (graph_ids == batch).astype(jnp.float32)                 # [G, TN] (already transposed)

    # Natural [G,TN] @ [TN,H] contraction -> no XLU relayout of the one-hot.
    pooled_ref[...] += jnp.dot(onehot, h, preferred_element_type=jnp.float32)
    # Counts via lane reduction (XLU slot) instead of a width-1 MXU matmul.
    counts_ref[...] += jnp.sum(onehot, axis=1, keepdims=True)

    # ---- finalize: exact mean, then the tiny [G, H] @ [H, Dout] second Linear ----
    @pl.when(i == pl.num_programs(0) - 1)
    def _finalize():
        mean_h = pooled_ref[...] / jnp.maximum(counts_ref[...], 1.0)  # exact divide (runs once)
        out_ref[...] = (jnp.dot(mean_h, w2_ref[...],
                                preferred_element_type=jnp.float32)
                        + b2_ref[...])


def mlp_readout(node_features, batch, params, num_graphs, *,
                tile_n=4096, compute_dtype=jnp.bfloat16):
    """node_features: [N, Din], batch: [N] int32 graph ids in [0, num_graphs)."""
    n, din = node_features.shape
    w1, b1, gamma, beta, run_mean, run_var, w2, b2 = params
    hdim = w1.shape[0]
    dout = w2.shape[0]
    eps = 1e-5

    # Fold eval-mode BatchNorm + b1 into the first Linear (cheap host-side prep).
    bn_scale = gamma / jnp.sqrt(run_var + eps)                        # [H]
    w1_fused = (w1.T * bn_scale[None, :]).astype(compute_dtype)       # [Din, H]
    b1_fused = ((b1 - run_mean) * bn_scale + beta).astype(jnp.float32)  # [H]

    # Lane/sublane padding: feature dims -> 128, graphs -> 8, nodes -> tile.
    din_p = _round_up(din, 128)
    h_p = _round_up(hdim, 128)
    dout_p = _round_up(dout, 128)
    g_p = _round_up(num_graphs, 8)
    x_bytes = jnp.dtype(compute_dtype).itemsize

    def vmem_estimate(tn_):
        return (
            2 * tn_ * din_p * x_bytes              # streamed x (double-buffered)
            + 2 * tn_ * 4                          # streamed batch ids [1, tn]
            + 2 * din_p * h_p * x_bytes            # W1 (constant block still double-buffered)
            + 2 * (h_p + h_p * dout_p + dout_p) * 4  # b1, W2, b2 (ditto)
            + 2 * g_p * dout_p * 4                 # output block
            + (g_p * h_p + g_p * 128) * 4          # pooled/counts accumulators
            + (tn_ * h_p + g_p * tn_) * 4          # in-kernel h / one-hot temporaries
        )

    # Generation-aware VMEM budget (~48 MiB on v7x, ~96 MiB on v5e/v6e).
    try:
        vmem_cap = int(pltpu.get_tpu_info().vmem_capacity_bytes)
    except Exception:
        vmem_cap = 64 * 1024 * 1024
    vmem_budget = int(0.75 * vmem_cap)

    # Tile size: batch block is lane-dense (1, tn) -> tn must be a multiple of 128.
    tn = _round_up(min(tile_n, _round_up(n, 128)), 128)
    while tn > 128 and vmem_estimate(tn) > vmem_budget:
        tn //= 2
    n_p = _round_up(n, tn)
    num_tiles = n_p // tn
    est_vmem = vmem_estimate(tn)
    vmem_limit = int(min(max(2 * est_vmem, 16 * 1024 * 1024), vmem_budget))

    # Cast + pad x in one fused copy; skip entirely when already conforming.
    if n == n_p and din == din_p and node_features.dtype == jnp.dtype(compute_dtype):
        x_p = node_features
    else:
        x_p = jnp.zeros((n_p, din_p), compute_dtype).at[:n, :din].set(
            node_features.astype(compute_dtype))

    # Lane-dense batch ids; padded rows get an out-of-range id -> dropped by one-hot.
    batch_p = jnp.full((1, n_p), g_p, dtype=jnp.int32).at[0, :n].set(
        batch.astype(jnp.int32))

    w1_p = jnp.zeros((din_p, h_p), compute_dtype).at[:din, :hdim].set(w1_fused)
    b1_p = jnp.zeros((1, h_p), jnp.float32).at[0, :hdim].set(b1_fused)
    w2_p = jnp.zeros((h_p, dout_p), jnp.float32).at[:hdim, :dout].set(
        w2.T.astype(jnp.float32))
    b2_p = jnp.zeros((1, dout_p), jnp.float32).at[0, :dout].set(
        b2.astype(jnp.float32))

    flops = (2 * n_p * din_p * h_p          # x @ W1
             + 2 * n_p * g_p * h_p          # one-hot segment-sum
             + 2 * g_p * h_p * dout_p)      # mean_h @ W2
    bytes_accessed = (n_p * din_p * x_bytes + n_p * 4                 # x + batch ids
                      + din_p * h_p * x_bytes                         # W1
                      + (h_p + h_p * dout_p + dout_p) * 4             # b1, W2, b2
                      + g_p * dout_p * 4)                             # output

    grid_spec = pltpu.PrefetchScalarGridSpec(
        num_scalar_prefetch=0,
        grid=(num_tiles,),
        in_specs=[
            pl.BlockSpec((tn, din_p), lambda i: (i, 0)),     # x (streamed, bf16)
            pl.BlockSpec((1, tn), lambda i: (0, i)),         # batch ids (streamed, lane-dense)
            pl.BlockSpec((din_p, h_p), lambda i: (0, 0)),    # fused W1 (resident)
            pl.BlockSpec((1, h_p), lambda i: (0, 0)),        # fused bias
            pl.BlockSpec((h_p, dout_p), lambda i: (0, 0)),   # W2
            pl.BlockSpec((1, dout_p), lambda i: (0, 0)),     # b2
        ],
        out_specs=pl.BlockSpec((g_p, dout_p), lambda i: (0, 0)),  # resident output block
        scratch_shapes=[
            pltpu.VMEM((g_p, h_p), jnp.float32),   # pooled sum of relu(h)
            pltpu.VMEM((g_p, 1), jnp.float32),     # per-graph node counts
        ],
    )

    out_padded = pl.pallas_call(
        mlp_readout_kernel,
        out_shape=jax.ShapeDtypeStruct((g_p, dout_p), jnp.float32),
        grid_spec=grid_spec,
        compiler_params=pltpu.CompilerParams(
            dimension_semantics=("arbitrary",),   # N axis reduces into shared output
            vmem_limit_bytes=vmem_limit,
        ),
        cost_estimate=pl.CostEstimate(
            flops=flops, transcendentals=0, bytes_accessed=bytes_accessed),
    )(x_p, batch_p, w1_p, b1_p, w2_p, b2_p)

    return out_padded[:num_graphs, :dout]


def _reference(node_features, batch, params, num_graphs):
    """Pure-JAX reference (eval-mode) for correctness checking."""
    w1, b1, gamma, beta, run_mean, run_var, w2, b2 = params
    eps = 1e-5
    h = node_features @ w1.T + b1
    h = (h - run_mean) / jnp.sqrt(run_var + eps) * gamma + beta
    h = jnp.maximum(h, 0.0)
    y = h @ w2.T + b2
    sums = jax.ops.segment_sum(y, batch, num_segments=num_graphs)
    counts = jax.ops.segment_sum(jnp.ones((y.shape[0],)), batch,
                                 num_segments=num_graphs)
    return sums / jnp.maximum(counts, 1.0)[:, None]


def _make_params(key, din, hdim, dout):
    keys = jax.random.split(key, 8)
    w1 = jax.random.normal(keys[0], (hdim, din), dtype=jnp.float32) * 0.1
    b1 = jax.random.normal(keys[1], (hdim,), dtype=jnp.float32) * 0.05
    gamma = 1.0 + 0.1 * jax.random.normal(keys[2], (hdim,), dtype=jnp.float32)
    beta = 0.05 * jax.random.normal(keys[3], (hdim,), dtype=jnp.float32)
    run_mean = 0.1 * jax.random.normal(keys[4], (hdim,), dtype=jnp.float32)
    run_var = jnp.abs(1.0 + 0.1 * jax.random.normal(keys[5], (hdim,), dtype=jnp.float32))
    w2 = jax.random.normal(keys[6], (dout, hdim), dtype=jnp.float32) * 0.1
    b2 = jnp.linspace(-0.1, 0.1, dout, dtype=jnp.float32)
    return (w1, b1, gamma, beta, run_mean, run_var, w2, b2)


if __name__ == "__main__":
    key = jax.random.PRNGKey(0)
    k0, k1, k2 = jax.random.split(key, 3)

    # ---- test 1: small shapes, single tile ----
    N, DIN, H, DOUT, G = 16, 32, 64, 8, 4
    x = jax.random.normal(k0, (N, DIN), dtype=jnp.float32)
    batch = jnp.arange(N, dtype=jnp.int32) % G            # round-robin over G graphs
    params = _make_params(k1, DIN, H, DOUT)
    ref = _reference(x, batch, params, G)

    out_f32 = jax.block_until_ready(
        mlp_readout(x, batch, params, G, compute_dtype=jnp.float32))
    assert out_f32.shape == (G, DOUT)
    assert jnp.allclose(out_f32, ref, atol=1e-4, rtol=1e-4), "f32 mismatch (small)"

    out_bf16 = jax.block_until_ready(mlp_readout(x, batch, params, G))
    assert out_bf16.shape == (G, DOUT)
    assert jnp.allclose(out_bf16, ref, atol=2e-2, rtol=2e-2), "bf16 mismatch (small)"

    # ---- test 2: multi-tile with non-divisible N (exercises accumulate/finalize) ----
    N2, DIN2, H2, DOUT2, G2 = 1000, 48, 96, 24, 10
    x2 = jax.random.normal(k2, (N2, DIN2), dtype=jnp.float32)
    batch2 = (jnp.arange(N2, dtype=jnp.int32) * G2) // N2   # sorted, every graph non-empty
    params2 = _make_params(jax.random.PRNGKey(2), DIN2, H2, DOUT2)
    ref2 = _reference(x2, batch2, params2, G2)

    out2_f32 = jax.block_until_ready(
        mlp_readout(x2, batch2, params2, G2, tile_n=256, compute_dtype=jnp.float32))
    assert out2_f32.shape == (G2, DOUT2)
    assert jnp.allclose(out2_f32, ref2, atol=1e-3, rtol=1e-3), "f32 mismatch (multi-tile)"

    out2_bf16 = jax.block_until_ready(
        mlp_readout(x2, batch2, params2, G2, tile_n=256))
    assert jnp.allclose(out2_bf16, ref2, atol=2e-2, rtol=2e-2), "bf16 mismatch (multi-tile)"

    print("KERNEL_OK")
</pallas_src>

<mosaic_0001>
module attributes {stable_mosaic.version = 11 : i64} {
  func.func @mlp_readout_kernel(%arg0: i32, %arg1: memref<128x128xf32, #tpu.memory_space<vmem>>, %arg2: memref<1x128xi32, #tpu.memory_space<vmem>>, %arg3: memref<128x128xf32, #tpu.memory_space<vmem>>, %arg4: memref<1x128xf32, #tpu.memory_space<vmem>>, %arg5: memref<128x128xf32, #tpu.memory_space<vmem>>, %arg6: memref<1x128xf32, #tpu.memory_space<vmem>>, %arg7: memref<8x128xf32, #tpu.memory_space<vmem>>, %arg8: memref<8x128xf32, #tpu.memory_space<vmem>>, %arg9: memref<8x1xf32, #tpu.memory_space<vmem>>) attributes {dimension_semantics = [#tpu.dimension_semantics<arbitrary>], iteration_bounds = array<i64: 1>, scalar_prefetch = 0 : i64, scratch_operands = 2 : i64, tpu.core_type = #tpu.core_type<tc>, window_params = [{transform_indices = @transform_0, window_bounds = array<i64: 128, 128>}, {transform_indices = @transform_1, window_bounds = array<i64: 1, 128>}, {pipeline_mode = #tpu.pipeline_mode<synchronous>, transform_indices = @transform_2, window_bounds = array<i64: 128, 128>}, {pipeline_mode = #tpu.pipeline_mode<synchronous>, transform_indices = @transform_3, window_bounds = array<i64: 1, 128>}, {pipeline_mode = #tpu.pipeline_mode<synchronous>, transform_indices = @transform_4, window_bounds = array<i64: 128, 128>}, {pipeline_mode = #tpu.pipeline_mode<synchronous>, transform_indices = @transform_5, window_bounds = array<i64: 1, 128>}, {pipeline_mode = #tpu.pipeline_mode<synchronous>, transform_indices = @transform_6, window_bounds = array<i64: 8, 128>}]} {
    %c0_i32 = arith.constant 0 : i32
    %0 = arith.cmpi eq, %arg0, %c0_i32 : i32
    %1 = arith.extui %0 : i1 to i32
    %c0_i32_0 = arith.constant 0 : i32
    %2 = arith.cmpi ne, %1, %c0_i32_0 : i32
    scf.if %2 {
      %cst_21 = arith.constant 0.000000e+00 : f32
      %29 = vector.broadcast %cst_21 : f32 to vector<8x128xf32>
      %c0_22 = arith.constant 0 : index
      %c0_23 = arith.constant 0 : index
      %30 = vector.load %arg8[%c0_22, %c0_23] : memref<8x128xf32, #tpu.memory_space<vmem>>, vector<8x128xf32>
      tpu.vector_store %arg8[%c0_22, %c0_23], %29 {strides = array<i32>} : memref<8x128xf32, #tpu.memory_space<vmem>>, vector<8x128xf32>,
      %cst_24 = arith.constant 0.000000e+00 : f32
      %31 = vector.broadcast %cst_24 : f32 to vector<8x1xf32>
      %c0_25 = arith.constant 0 : index
      %c0_26 = arith.constant 0 : index
      %32 = vector.load %arg9[%c0_25, %c0_26] : memref<8x1xf32, #tpu.memory_space<vmem>>, vector<8x1xf32>
      tpu.vector_store %arg9[%c0_25, %c0_26], %31 {strides = array<i32>} : memref<8x1xf32, #tpu.memory_space<vmem>>, vector<8x1xf32>,
    } else {
    }
    %c0 = arith.constant 0 : index
    %c0_1 = arith.constant 0 : index
    %3 = vector.load %arg1[%c0, %c0_1] : memref<128x128xf32, #tpu.memory_space<vmem>>, vector<128x128xf32>
    %c0_2 = arith.constant 0 : index
    %c0_3 = arith.constant 0 : index
    %4 = vector.load %arg3[%c0_2, %c0_3] : memref<128x128xf32, #tpu.memory_space<vmem>>, vector<128x128xf32>
    %cst = arith.constant dense<0.000000e+00> : vector<128x128xf32>
    %5 = tpu.matmul %3, %4, %cst {dimension_numbers = #tpu.dot_dimension_numbers<[1], [0], [0], [1], [0, 0, 1, 1], [], []>} : vector<128x128xf32>, vector<128x128xf32>, vector<128x128xf32> -> vector<128x128xf32>
    %c0_4 = arith.constant 0 : index
    %c0_5 = arith.constant 0 : index
    %6 = vector.load %arg4[%c0_4, %c0_5] : memref<1x128xf32, #tpu.memory_space<vmem>>, vector<1x128xf32>
    %7 = vector.broadcast %6 : vector<1x128xf32> to vector<128x128xf32>
    %8 = arith.addf %5, %7 : vector<128x128xf32>
    %cst_6 = arith.constant 0.000000e+00 : f32
    %9 = vector.broadcast %cst_6 : f32 to vector<128x128xf32>
    %10 = arith.maximumf %8, %9 : vector<128x128xf32>
    %c0_7 = arith.constant 0 : index
    %c0_8 = arith.constant 0 : index
    %11 = vector.load %arg2[%c0_7, %c0_8] : memref<1x128xi32, #tpu.memory_space<vmem>>, vector<1x128xi32>
    %12 = tpu.iota {dimensions = array<i32: 0>} : vector<8x128xi32>
    %13 = vector.broadcast %11 : vector<1x128xi32> to vector<8x128xi32>
    %14 = arith.cmpi eq, %12, %13 : vector<8x128xi32>
    %15 = arith.extui %14 : vector<8x128xi1> to vector<8x128xi32>
    %16 = arith.sitofp %15 : vector<8x128xi32> to vector<8x128xf32>
    %c0_9 = arith.constant 0 : index
    %c0_10 = arith.constant 0 : index
    %17 = vector.load %arg8[%c0_9, %c0_10] : memref<8x128xf32, #tpu.memory_space<vmem>>, vector<8x128xf32>
    %cst_11 = arith.constant dense<0.000000e+00> : vector<8x128xf32>
    %18 = tpu.matmul %16, %10, %cst_11 {dimension_numbers = #tpu.dot_dimension_numbers<[1], [0], [0], [1], [0, 0, 1, 1], [], []>} : vector<8x128xf32>, vector<128x128xf32>, vector<8x128xf32> -> vector<8x128xf32>
    %19 = arith.addf %17, %18 : vector<8x128xf32>
    %c0_12 = arith.constant 0 : index
    %c0_13 = arith.constant 0 : index
    %20 = vector.load %arg8[%c0_12, %c0_13] : memref<8x128xf32, #tpu.memory_space<vmem>>, vector<8x128xf32>
    tpu.vector_store %arg8[%c0_12, %c0_13], %19 {strides = array<i32>} : memref<8x128xf32, #tpu.memory_space<vmem>>, vector<8x128xf32>,
    %c0_14 = arith.constant 0 : index
    %c0_15 = arith.constant 0 : index
    %21 = vector.load %arg9[%c0_14, %c0_15] : memref<8x1xf32, #tpu.memory_space<vmem>>, vector<8x1xf32>
    %cst_16 = arith.constant dense<0.000000e+00> : vector<8xf32>
    %22 = vector.multi_reduction <add>, %16, %cst_16 [1] : vector<8x128xf32> to vector<8xf32>
    %23 = vector.shape_cast %22 : vector<8xf32> to vector<8x1xf32>
    %24 = arith.addf %21, %23 : vector<8x1xf32>
    %c0_17 = arith.constant 0 : index
    %c0_18 = arith.constant 0 : index
    %25 = vector.load %arg9[%c0_17, %c0_18] : memref<8x1xf32, #tpu.memory_space<vmem>>, vector<8x1xf32>
    tpu.vector_store %arg9[%c0_17, %c0_18], %24 {strides = array<i32>} : memref<8x1xf32, #tpu.memory_space<vmem>>, vector<8x1xf32>,
    %c0_i32_19 = arith.constant 0 : i32
    %26 = arith.cmpi eq, %arg0, %c0_i32_19 : i32
    %27 = arith.extui %26 : i1 to i32
    %c0_i32_20 = arith.constant 0 : i32
    %28 = arith.cmpi ne, %27, %c0_i32_20 : i32
    scf.if %28 {
      %c0_21 = arith.constant 0 : index
      %c0_22 = arith.constant 0 : index
      %29 = vector.load %arg8[%c0_21, %c0_22] : memref<8x128xf32, #tpu.memory_space<vmem>>, vector<8x128xf32>
      %c0_23 = arith.constant 0 : index
      %c0_24 = arith.constant 0 : index
      %30 = vector.load %arg9[%c0_23, %c0_24] : memref<8x1xf32, #tpu.memory_space<vmem>>, vector<8x1xf32>
      %cst_25 = arith.constant 1.000000e+00 : f32
      %31 = vector.broadcast %cst_25 : f32 to vector<8x1xf32>
      %32 = arith.maximumf %30, %31 : vector<8x1xf32>
      %33 = vector.broadcast %32 : vector<8x1xf32> to vector<8x128xf32>
      %34 = arith.divf %29, %33 : vector<8x128xf32>
      %c0_26 = arith.constant 0 : index
      %c0_27 = arith.constant 0 : index
      %35 = vector.load %arg5[%c0_26, %c0_27] : memref<128x128xf32, #tpu.memory_space<vmem>>, vector<128x128xf32>
      %cst_28 = arith.constant dense<0.000000e+00> : vector<8x128xf32>
      %36 = tpu.matmul %34, %35, %cst_28 {dimension_numbers = #tpu.dot_dimension_numbers<[1], [0], [0], [1], [0, 0, 1, 1], [], []>} : vector<8x128xf32>, vector<128x128xf32>, vector<8x128xf32> -> vector<8x128xf32>
      %c0_29 = arith.constant 0 : index
      %c0_30 = arith.constant 0 : index
      %37 = vector.load %arg6[%c0_29, %c0_30] : memref<1x128xf32, #tpu.memory_space<vmem>>, vector<1x128xf32>
      %38 = vector.broadcast %37 : vector<1x128xf32> to vector<8x128xf32>
      %39 = arith.addf %36, %38 : vector<8x128xf32>
      %c0_31 = arith.constant 0 : index
      %c0_32 = arith.constant 0 : index
      %40 = vector.load %arg7[%c0_31, %c0_32] : memref<8x128xf32, #tpu.memory_space<vmem>>, vector<8x128xf32>
      tpu.vector_store %arg7[%c0_31, %c0_32], %39 {strides = array<i32>} : memref<8x128xf32, #tpu.memory_space<vmem>>, vector<8x128xf32>,
    } else {
    }
    return
  }
  func.func @transform_0(%arg0: i32) -> (i32, i32) {
    %c0_i32 = arith.constant 0 : i32
    %c0_i32_0 = arith.constant 0 : i32
    return %arg0, %c0_i32 : i32, i32
  }
  func.func @transform_1(%arg0: i32) -> (i32, i32) {
    %c0_i32 = arith.constant 0 : i32
    %c0_i32_0 = arith.constant 0 : i32
    return %c0_i32, %arg0 : i32, i32
  }
  func.func @transform_2(%arg0: i32) -> (i32, i32) {
    %c0_i32 = arith.constant 0 : i32
    %c0_i32_0 = arith.constant 0 : i32
    %c0_i32_1 = arith.constant 0 : i32
    return %c0_i32, %c0_i32_0 : i32, i32
  }
  func.func @transform_3(%arg0: i32) -> (i32, i32) {
    %c0_i32 = arith.constant 0 : i32
    %c0_i32_0 = arith.constant 0 : i32
    %c0_i32_1 = arith.constant 0 : i32
    return %c0_i32, %c0_i32_0 : i32, i32
  }
  func.func @transform_4(%arg0: i32) -> (i32, i32) {
    %c0_i32 = arith.constant 0 : i32
    %c0_i32_0 = arith.constant 0 : i32
    %c0_i32_1 = arith.constant 0 : i32
    return %c0_i32, %c0_i32_0 : i32, i32
  }
  func.func @transform_5(%arg0: i32) -> (i32, i32) {
    %c0_i32 = arith.constant 0 : i32
    %c0_i32_0 = arith.constant 0 : i32
    %c0_i32_1 = arith.constant 0 : i32
    return %c0_i32, %c0_i32_0 : i32, i32
  }
  func.func @transform_6(%arg0: i32) -> (i32, i32) {
    %c0_i32 = arith.constant 0 : i32
    %c0_i32_0 = arith.constant 0 : i32
    %c0_i32_1 = arith.constant 0 : i32
    return %c0_i32, %c0_i32_0 : i32, i32
  }
}

</mosaic_0001>

<llo_original>
// kernel: tpu_custom_call.1
$region0: #{tpu_custom_call.1}
  #allocation0 [shape = 'u32[]', space=smem, size = 0x4, offset = 0x4, fixed_abs, tag = 'smem constant byte address 0x4 - core index']
  #allocation1 [shape = 'u32[144,128]{1,0:T(1,128)}', space=vmem, size = 0x12000, scoped, tag = 'internal scratch']
  #allocation2 [shape = 'f32[8,128]{1,0:T(8,128)}', space=vmem, size = 0x1000, scoped, tag = 'scratch operand']
  #allocation3 [shape = 'f32[8,1]{1,0:T(8,128)}', space=vmem, size = 0x1000, scoped, tag = 'scratch operand']
  %s0 = inlined_call_operand.hbm [shape: f32[128,128], index: 0, kind: input, shape index: {}]
  %s1 = inlined_call_operand.vmem [shape: s32[1,128], index: 1, kind: input, shape index: {}]
  %s2 = inlined_call_operand.hbm [shape: f32[128,128], index: 2, kind: input, shape index: {}]
  %s3 = inlined_call_operand.vmem [shape: f32[1,128], index: 3, kind: input, shape index: {}]
  %s4 = inlined_call_operand.hbm [shape: f32[128,128], index: 4, kind: input, shape index: {}]
  %s5 = inlined_call_operand.vmem [shape: f32[1,128], index: 5, kind: input, shape index: {}]
  %s6 = inlined_call_operand.hbm [shape: f32[8,128], index: 6, kind: output, shape index: {}]
  %s7 = sld [smem:[#allocation0]]
  $region54: #{tpu_custom_call.1} parent=0
    _
  %s9 = ssub.s32 1, %s7
  %s10 = scalar_select 0, %s9, %s7
  $region1: #{tpu_custom_call.1} parent=0
    #allocation4 [shape = 'u8[65536]{0}', space=vmem, size = 0x10000, scoped, tag = 'input window, operand 0, single buffered']
    #allocation5 [shape = 's32[1]{0}', space=sflag, size = 0x4, scoped, tag = 'scoped memory for tpu_custom_call.1']
    #allocation6 [shape = 's32[1]{0}', space=sflag, size = 0x4, scoped, tag = 'scoped memory for tpu_custom_call.1']
    #allocation7 [shape = 'u8[65536]{0}', space=vmem, size = 0x10000, scoped, tag = 'input window, operand 2, single buffered']
    #allocation8 [shape = 's32[1]{0}', space=sflag, size = 0x4, scoped, tag = 'scoped memory for tpu_custom_call.1']
    #allocation9 [shape = 'u8[65536]{0}', space=vmem, size = 0x10000, scoped, tag = 'input window, operand 4, single buffered']
    #allocation10 [shape = 'u8[4096]{0}', space=vmem, size = 0x1000, scoped, tag = 'output window, operand 0, single buffered']
    %11 = vsyncpa [#allocation5], 0
    %12 = vsyncpa [#allocation8], 0
    %13 = vsyncpa [#allocation6], 0
    // Predicated region
    $region2: #{tpu_custom_call.1} parent=1 // pred_check
      _
    $region3: #{tpu_custom_call.1} parent=1 // pred_check_branch
      %15 = sbr.rel (0) target = $region5
    $region4: #{tpu_custom_call.1} parent=1 // pred_region
      %s17 = ssub.s32 2048, 2048
      %18 = vsyncadd [#allocation5], %s17
      %s19 = sshll.u32 [#allocation4], 4
      %s20 = int_to_ptr.vmem [resolvable:$true] %s19
      %25 = dma.hbm_to_vmem [thread:$0]  %s0, 2048, %s20, [#allocation5], 128, 128, 8
    $region5: #{tpu_custom_call.1} parent=1 // pred_fallthru
      _
    // Predicated region
    $region6: #{tpu_custom_call.1} parent=1 // pred_check
      _
    $region7: #{tpu_custom_call.1} parent=1 // pred_check_branch
      %27 = sbr.rel (0) target = $region9
    $region8: #{tpu_custom_call.1} parent=1 // pred_region
      _
    $region9: #{tpu_custom_call.1} parent=1 // pred_fallthru
      _
    // Predicated region
    $region10: #{tpu_custom_call.1} parent=1 // pred_check
      _
    $region11: #{tpu_custom_call.1} parent=1 // pred_check_branch
      %29 = sbr.rel (0) target = $region13
    $region12: #{tpu_custom_call.1} parent=1 // pred_region
      %s31 = ssub.s32 2048, 2048
      %32 = vsyncadd [#allocation8], %s31
      %s33 = sshll.u32 [#allocation7], 4
      %s34 = int_to_ptr.vmem [resolvable:$true] %s33
      %39 = dma.hbm_to_vmem [thread:$0]  %s2, 2048, %s34, [#allocation8], 128, 128, 8
    $region13: #{tpu_custom_call.1} parent=1 // pred_fallthru
      _
    // Predicated region
    $region14: #{tpu_custom_call.1} parent=1 // pred_check
      _
    $region15: #{tpu_custom_call.1} parent=1 // pred_check_branch
      %41 = sbr.rel (0) target = $region17
    $region16: #{tpu_custom_call.1} parent=1 // pred_region
      _
    $region17: #{tpu_custom_call.1} parent=1 // pred_fallthru
      _
    // Predicated region
    $region18: #{tpu_custom_call.1} parent=1 // pred_check
      _
    $region19: #{tpu_custom_call.1} parent=1 // pred_check_branch
      %43 = sbr.rel (0) target = $region21
    $region20: #{tpu_custom_call.1} parent=1 // pred_region
      %s45 = ssub.s32 2048, 2048
      %46 = vsyncadd [#allocation8], %s45
      %s47 = sshll.u32 [#allocation9], 4
      %s48 = int_to_ptr.vmem [resolvable:$true] %s47
      %53 = dma.hbm_to_vmem [thread:$0]  %s4, 2048, %s48, [#allocation8], 128, 128, 8
    $region21: #{tpu_custom_call.1} parent=1 // pred_fallthru
      _
    // Predicated region
    $region22: #{tpu_custom_call.1} parent=1 // pred_check
      _
    $region23: #{tpu_custom_call.1} parent=1 // pred_check_branch
      %55 = sbr.rel (0) target = $region25
    $region24: #{tpu_custom_call.1} parent=1 // pred_region
      _
    $region25: #{tpu_custom_call.1} parent=1 // pred_fallthru
      _
    // Predicated region
    $region26: #{tpu_custom_call.1} parent=1 // pred_check
      _
    $region27: #{tpu_custom_call.1} parent=1 // pred_check_branch
      %57 = sbr.rel (0) target = $region29
    $region28: #{tpu_custom_call.1} parent=1 // pred_region
      %58 = dma.done [#allocation5], 2048
    $region29: #{tpu_custom_call.1} parent=1 // pred_fallthru
      _
    // Predicated region
    $region30: #{tpu_custom_call.1} parent=1 // pred_check
      _
    $region31: #{tpu_custom_call.1} parent=1 // pred_check_branch
      %60 = sbr.rel (0) target = $region33
    $region32: #{tpu_custom_call.1} parent=1 // pred_region
      %61 = dma.done [#allocation8], 2048
    $region33: #{tpu_custom_call.1} parent=1 // pred_fallthru
      _
    // Predicated region
    $region34: #{tpu_custom_call.1} parent=1 // pred_check
      _
    $region35: #{tpu_custom_call.1} parent=1 // pred_check_branch
      %63 = sbr.rel (0) target = $region37
    $region36: #{tpu_custom_call.1} parent=1 // pred_region
      %64 = dma.done [#allocation8], 2048
    $region37: #{tpu_custom_call.1} parent=1 // pred_fallthru
      _
    %p65 = scmp.eq.s32.totalorder 0, 0
    // Predicated region
    $region38: #{tpu_custom_call.1} parent=1 // pred_check
      %p66 = pneg %p65
    $region39: #{tpu_custom_call.1} parent=1 // pred_check_branch
      %68 = sbr.rel (%p66) target = $region41
    $region40: #{tpu_custom_call.1} parent=1 // pred_region
      %69 = vst [vmem:[#allocation2] sm:$0xff] 0.0
      %vm70 = vcmask 7168
      %71 = vst.msk [vmem:[#allocation3] sm:$0xff] %vm70, 0.0
    $region41: #{tpu_custom_call.1} parent=1 // pred_fallthru
      _
    %v72 = vld [vmem:[#allocation4] sm:$0xff]
    %v73 = vld [vmem:[#allocation4 + $0x8] sm:$0xff]
    %v74 = vld [vmem:[#allocation4 + $0x10] sm:$0xff]
    %v75 = vld [vmem:[#allocation4 + $0x18] sm:$0xff]
    %v76 = vld [vmem:[#allocation4 + $0x20] sm:$0xff]
    %v77 = vld [vmem:[#allocation4 + $0x28] sm:$0xff]
    %v78 = vld [vmem:[#allocation4 + $0x30] sm:$0xff]
    %v79 = vld [vmem:[#allocation4 + $0x38] sm:$0xff]
    %v80 = vld [vmem:[#allocation4 + $0x40] sm:$0xff]
    %v81 = vld [vmem:[#allocation4 + $0x48] sm:$0xff]
    %v82 = vld [vmem:[#allocation4 + $0x50] sm:$0xff]
    %v83 = vld [vmem:[#allocation4 + $0x58] sm:$0xff]
    %v84 = vld [vmem:[#allocation4 + $0x60] sm:$0xff]
    %v85 = vld [vmem:[#allocation4 + $0x68] sm:$0xff]
    %v86 = vld [vmem:[#allocation4 + $0x70] sm:$0xff]
    %v87 = vld [vmem:[#allocation4 + $0x78] sm:$0xff]
    %v88 = vld [vmem:[#allocation7] sm:$0xff]
    %v89 = vld [vmem:[#allocation7 + $0x8] sm:$0xff]
    %v90 = vld [vmem:[#allocation7 + $0x10] sm:$0xff]
    %v91 = vld [vmem:[#allocation7 + $0x18] sm:$0xff]
    %v92 = vld [vmem:[#allocation7 + $0x20] sm:$0xff]
    %v93 = vld [vmem:[#allocation7 + $0x28] sm:$0xff]
    %v94 = vld [vmem:[#allocation7 + $0x30] sm:$0xff]
    %v95 = vld [vmem:[#allocation7 + $0x38] sm:$0xff]
    %v96 = vld [vmem:[#allocation7 + $0x40] sm:$0xff]
    %v97 = vld [vmem:[#allocation7 + $0x48] sm:$0xff]
    %v98 = vld [vmem:[#allocation7 + $0x50] sm:$0xff]
    %v99 = vld [vmem:[#allocation7 + $0x58] sm:$0xff]
    %v100 = vld [vmem:[#allocation7 + $0x60] sm:$0xff]
    %v101 = vld [vmem:[#allocation7 + $0x68] sm:$0xff]
    %v102 = vld [vmem:[#allocation7 + $0x70] sm:$0xff]
    %v103 = vld [vmem:[#allocation7 + $0x78] sm:$0xff]
    %v104 = vld [vmem:[%s3] sm:$0x1]
    %v106 = vlaneseq
    %v107 = vshrl.u32 %v106, 7
    %v108 = vsub.s32 0, %v107
    %v109 = vrot.slane %v104, %v108
    %111 = vmatprep.subr.mxu0 0.0
    %112 = vmatpush1.msra.mxu0 %v103
    %113 = vmatprep.subr.mxu0 0.0
    %114 = vmatpush1.msra.mxu0 %v102
    %115 = vmatprep.subr.mxu0 0.0
    %116 = vmatpush1.msra.mxu0 %v101
    %117 = vmatprep.subr.mxu0 0.0
    %118 = vmatpush1.msra.mxu0 %v100
    %119 = vmatprep.subr.mxu0 0.0
    %120 = vmatpush1.msra.mxu0 %v99
    %121 = vmatprep.subr.mxu0 0.0
    %122 = vmatpush1.msra.mxu0 %v98
    %123 = vmatprep.subr.mxu0 0.0
    %124 = vmatpush1.msra.mxu0 %v97
    %125 = vmatprep.subr.mxu0 0.0
    %126 = vmatpush1.msra.mxu0 %v96
    %127 = vmatprep.subr.mxu0 0.0
    %128 = vmatpush1.msra.mxu0 %v95
    %129 = vmatprep.subr.mxu0 0.0
    %130 = vmatpush1.msra.mxu0 %v94
    %131 = vmatprep.subr.mxu0 0.0
    %132 = vmatpush1.msra.mxu0 %v93
    %133 = vmatprep.subr.mxu0 0.0
    %134 = vmatpush1.msra.mxu0 %v92
    %135 = vmatprep.subr.mxu0 0.0
    %136 = vmatpush1.msra.mxu0 %v91
    %137 = vmatprep.subr.mxu0 0.0
    %138 = vmatpush1.msra.mxu0 %v90
    %139 = vmatprep.subr.mxu0 0.0
    %140 = vmatpush1.msra.mxu0 %v89
    %141 = vmatprep.subr.mxu0 0.0
    %142 = vmatpush1.msra.mxu0 %v88
    %143 = vmatprep.subr.mxu0 0.0
    %144 = vmatpush2.msra.mxu0 0.0
    %145 = vmatprep.subr.mxu0 0.0
    %146 = vmatpush2.msra.mxu0 0.0
    %147 = vmatprep.subr.mxu0 0.0
    %148 = vmatpush2.msra.mxu0 0.0
    %149 = vmatprep.subr.mxu0 0.0
    %150 = vmatpush2.msra.mxu0 0.0
    %151 = vmatprep.subr.mxu0 0.0
    %152 = vmatpush2.msra.mxu0 0.0
    %153 = vmatprep.subr.mxu0 0.0
    %154 = vmatpush2.msra.mxu0 0.0
    %155 = vmatprep.subr.mxu0 0.0
    %156 = vmatpush2.msra.mxu0 0.0
    %157 = vmatprep.subr.mxu0 0.0
    %158 = vmatpush2.msra.mxu0 0.0
    %159 = vmatprep.subr.mxu0 0.0
    %160 = vmatpush2.msra.mxu0 0.0
    %161 = vmatprep.subr.mxu0 0.0
    %162 = vmatpush2.msra.mxu0 0.0
    %163 = vmatprep.subr.mxu0 0.0
    %164 = vmatpush2.msra.mxu0 0.0
    %165 = vmatprep.subr.mxu0 0.0
    %166 = vmatpush2.msra.mxu0 0.0
    %167 = vmatprep.subr.mxu0 0.0
    %168 = vmatpush2.msra.mxu0 0.0
    %169 = vmatprep.subr.mxu0 0.0
    %170 = vmatpush2.msra.mxu0 0.0
    %171 = vmatprep.subr.mxu0 0.0
    %172 = vmatpush2.msra.mxu0 0.0
    %173 = vmatprep.subr.mxu0 0.0
    %174 = vmatpush2.msra.mxu0 0.0
    %175 = vmatprep.mubr.f32.mxu0 0.0
    %176 = vmatmul.mubr.f32.gmra.mxu0 %v72
    %v177 = vpop.f32.mrf.mxu0
    %v178 = vadd.f32 %v109, %v177
    %v179 = vpop.f32.mrf.mxu0
    %180 = vmatprep.mubr.f32.mxu0 0.0
    %181 = vmatmul.mubr.f32.gmra.mxu0 %v73
    %v182 = vpop.f32.mrf.mxu0
    %v183 = vadd.f32 %v109, %v182
    %v184 = vpop.f32.mrf.mxu0
    %185 = vmatprep.mubr.f32.mxu0 0.0
    %186 = vmatmul.mubr.f32.gmra.mxu0 %v74
    %v187 = vpop.f32.mrf.mxu0
    %v188 = vadd.f32 %v109, %v187
    %v189 = vpop.f32.mrf.mxu0
    %190 = vmatprep.mubr.f32.mxu0 0.0
    %191 = vmatmul.mubr.f32.gmra.mxu0 %v75
    %v192 = vpop.f32.mrf.mxu0
    %v193 = vadd.f32 %v109, %v192
    %v194 = vpop.f32.mrf.mxu0
    %195 = vmatprep.mubr.f32.mxu0 0.0
    %196 = vmatmul.mubr.f32.gmra.mxu0 %v76
    %v197 = vpop.f32.mrf.mxu0
    %v198 = vadd.f32 %v109, %v197
    %v199 = vpop.f32.mrf.mxu0
    %200 = vmatprep.mubr.f32.mxu0 0.0
    %201 = vmatmul.mubr.f32.gmra.mxu0 %v77
    %v202 = vpop.f32.mrf.mxu0
    %v203 = vadd.f32 %v109, %v202
    %v204 = vpop.f32.mrf.mxu0
    %205 = vmatprep.mubr.f32.mxu0 0.0
    %206 = vmatmul.mubr.f32.gmra.mxu0 %v78
    %v207 = vpop.f32.mrf.mxu0
    %v208 = vadd.f32 %v109, %v207
    %v209 = vpop.f32.mrf.mxu0
    %210 = vmatprep.mubr.f32.mxu0 0.0
    %211 = vmatmul.mubr.f32.gmra.mxu0 %v79
    %v212 = vpop.f32.mrf.mxu0
    %v213 = vadd.f32 %v109, %v212
    %v214 = vpop.f32.mrf.mxu0
    %215 = vmatprep.mubr.f32.mxu0 0.0
    %216 = vmatmul.mubr.f32.gmra.mxu0 %v80
    %v217 = vpop.f32.mrf.mxu0
    %v218 = vadd.f32 %v109, %v217
    %v219 = vpop.f32.mrf.mxu0
    %220 = vmatprep.mubr.f32.mxu0 0.0
    %221 = vmatmul.mubr.f32.gmra.mxu0 %v81
    %v222 = vpop.f32.mrf.mxu0
    %v223 = vadd.f32 %v109, %v222
    %v224 = vpop.f32.mrf.mxu0
    %225 = vmatprep.mubr.f32.mxu0 0.0
    %226 = vmatmul.mubr.f32.gmra.mxu0 %v82
    %v227 = vpop.f32.mrf.mxu0
    %v228 = vadd.f32 %v109, %v227
    %v229 = vpop.f32.mrf.mxu0
    %230 = vmatprep.mubr.f32.mxu0 0.0
    %231 = vmatmul.mubr.f32.gmra.mxu0 %v83
    %v232 = vpop.f32.mrf.mxu0
    %v233 = vadd.f32 %v109, %v232
    %v234 = vpop.f32.mrf.mxu0
    %235 = vmatprep.mubr.f32.mxu0 0.0
    %236 = vmatmul.mubr.f32.gmra.mxu0 %v84
    %v237 = vpop.f32.mrf.mxu0
    %v238 = vadd.f32 %v109, %v237
    %v239 = vpop.f32.mrf.mxu0
    %240 = vmatprep.mubr.f32.mxu0 0.0
    %241 = vmatmul.mubr.f32.gmra.mxu0 %v85
    %v242 = vpop.f32.mrf.mxu0
    %v243 = vadd.f32 %v109, %v242
    %v244 = vpop.f32.mrf.mxu0
    %245 = vmatprep.mubr.f32.mxu0 0.0
    %246 = vmatmul.mubr.f32.gmra.mxu0 %v86
    %v247 = vpop.f32.mrf.mxu0
    %v248 = vadd.f32 %v109, %v247
    %v249 = vpop.f32.mrf.mxu0
    %250 = vmatprep.mubr.f32.mxu0 0.0
    %251 = vmatmul.mubr.f32.gmra.mxu0 %v87
    %v252 = vpop.f32.mrf.mxu0
    %v253 = vadd.f32 %v109, %v252
    %v254 = vpop.f32.mrf.mxu0
    %255 = vdwg.mxu0
    %v256 = vmax.f32 %v178, 0.0
    %v257 = vmax.f32 %v183, 0.0
    %v258 = vmax.f32 %v188, 0.0
    %v259 = vmax.f32 %v193, 0.0
    %v260 = vmax.f32 %v198, 0.0
    %v261 = vmax.f32 %v203, 0.0
    %v262 = vmax.f32 %v208, 0.0
    %v263 = vmax.f32 %v213, 0.0
    %v264 = vmax.f32 %v218, 0.0
    %v265 = vmax.f32 %v223, 0.0
    %v266 = vmax.f32 %v228, 0.0
    %v267 = vmax.f32 %v233, 0.0
    %v268 = vmax.f32 %v238, 0.0
    %v269 = vmax.f32 %v243, 0.0
    %v270 = vmax.f32 %v248, 0.0
    %v271 = vmax.f32 %v253, 0.0
    %v272 = vld [vmem:[%s1] sm:$0x1]
    %v273 = vlaneseq
    %v274 = vshrl.u32 %v273, 7
    %v275 = vlaneseq
    %v276 = vshrl.u32 %v275, 7
    %v277 = vsub.s32 0, %v276
    %v278 = vrot.slane %v272, %v277
    %vm279 = vcmp.eq.s32.totalorder %v274, %v278
    %v280 = vsel %vm279, 1, 0
    %v281 = vcvt.s32.f32 %v280
    %v282 = vld [vmem:[#allocation2] sm:$0xff]
    %283 = vmatprep.subr.mxu0 0.0
    %284 = vmatpush1.msra.mxu0 %v271
    %285 = vmatprep.subr.mxu0 0.0
    %286 = vmatpush1.msra.mxu0 %v270
    %287 = vmatprep.subr.mxu0 0.0
    %288 = vmatpush1.msra.mxu0 %v269
    %289 = vmatprep.subr.mxu0 0.0
    %290 = vmatpush1.msra.mxu0 %v268
    %291 = vmatprep.subr.mxu0 0.0
    %292 = vmatpush1.msra.mxu0 %v267
    %293 = vmatprep.subr.mxu0 0.0
    %294 = vmatpush1.msra.mxu0 %v266
    %295 = vmatprep.subr.mxu0 0.0
    %296 = vmatpush1.msra.mxu0 %v265
    %297 = vmatprep.subr.mxu0 0.0
    %298 = vmatpush1.msra.mxu0 %v264
    %299 = vmatprep.subr.mxu0 0.0
    %300 = vmatpush1.msra.mxu0 %v263
    %301 = vmatprep.subr.mxu0 0.0
    %302 = vmatpush1.msra.mxu0 %v262
    %303 = vmatprep.subr.mxu0 0.0
    %304 = vmatpush1.msra.mxu0 %v261
    %305 = vmatprep.subr.mxu0 0.0
    %306 = vmatpush1.msra.mxu0 %v260
    %307 = vmatprep.subr.mxu0 0.0
    %308 = vmatpush1.msra.mxu0 %v259
    %309 = vmatprep.subr.mxu0 0.0
    %310 = vmatpush1.msra.mxu0 %v258
    %311 = vmatprep.subr.mxu0 0.0
    %312 = vmatpush1.msra.mxu0 %v257
    %313 = vmatprep.subr.mxu0 0.0
    %314 = vmatpush1.msra.mxu0 %v256
    %315 = vmatprep.subr.mxu0 0.0
    %316 = vmatpush2.msra.mxu0 0.0
    %317 = vmatprep.subr.mxu0 0.0
    %318 = vmatpush2.msra.mxu0 0.0
    %319 = vmatprep.subr.mxu0 0.0
    %320 = vmatpush2.msra.mxu0 0.0
    %321 = vmatprep.subr.mxu0 0.0
    %322 = vmatpush2.msra.mxu0 0.0
    %323 = vmatprep.subr.mxu0 0.0
    %324 = vmatpush2.msra.mxu0 0.0
    %325 = vmatprep.subr.mxu0 0.0
    %326 = vmatpush2.msra.mxu0 0.0
    %327 = vmatprep.subr.mxu0 0.0
    %328 = vmatpush2.msra.mxu0 0.0
    %329 = vmatprep.subr.mxu0 0.0
    %330 = vmatpush2.msra.mxu0 0.0
    %331 = vmatprep.subr.mxu0 0.0
    %332 = vmatpush2.msra.mxu0 0.0
    %333 = vmatprep.subr.mxu0 0.0
    %334 = vmatpush2.msra.mxu0 0.0
    %335 = vmatprep.subr.mxu0 0.0
    %336 = vmatpush2.msra.mxu0 0.0
    %337 = vmatprep.subr.mxu0 0.0
    %338 = vmatpush2.msra.mxu0 0.0
    %339 = vmatprep.subr.mxu0 0.0
    %340 = vmatpush2.msra.mxu0 0.0
    %341 = vmatprep.subr.mxu0 0.0
    %342 = vmatpush2.msra.mxu0 0.0
    %343 = vmatprep.subr.mxu0 0.0
    %344 = vmatpush2.msra.mxu0 0.0
    %345 = vmatprep.subr.mxu0 0.0
    %346 = vmatpush2.msra.mxu0 0.0
    %347 = vmatprep.mubr.f32.mxu0 0.0
    %348 = vmatmul.mubr.f32.gmra.mxu0 %v281
    %v349 = vpop.f32.mrf.mxu0
    %v350 = vadd.f32 0.0, %v349
    %v351 = vpop.f32.mrf.mxu0
    %352 = vdwg.mxu0
    %v353 = vadd.f32 %v282, %v350
    %354 = vst [vmem:[#allocation2] sm:$0xff] %v353
    %v355 = vld [vmem:[#allocation3] sm:$0xff]
    %356 = vadd.xlane.f32.xlu0 %v281
    %v357 = vpop.xlane.xlu0 %356
    %v358 = vadd.f32 %v355, %v357
    %vm359 = vcmask 7168
    %360 = vst.msk [vmem:[#allocation3] sm:$0xff] %vm359, %v358
    // Predicated region
    $region42: #{tpu_custom_call.1} parent=1 // pred_check
      %p361 = pneg %p65
    $region43: #{tpu_custom_call.1} parent=1 // pred_check_branch
      %363 = sbr.rel (%p361) target = $region45
    $region44: #{tpu_custom_call.1} parent=1 // pred_region
      %v364 = vld [vmem:[#allocation2] sm:$0xff]
      %v365 = vld [vmem:[#allocation3] sm:$0xff]
      %v366 = vmax.f32 %v365, 1.0
      %368 = vset.pattern.permute.xlu0 0
      %369 = vperm.xlu0 %368, %v366
      %v370 = vpop.permute.xlu0 %369
      %v372 = vrcp.pop %v370
      %v373 = vmul.f32 %v364, %v372
      %v374 = vld [vmem:[#allocation9] sm:$0xff]
      %v375 = vld [vmem:[#allocation9 + $0x8] sm:$0xff]
      %v376 = vld [vmem:[#allocation9 + $0x10] sm:$0xff]
      %v377 = vld [vmem:[#allocation9 + $0x18] sm:$0xff]
      %v378 = vld [vmem:[#allocation9 + $0x20] sm:$0xff]
      %v379 = vld [vmem:[#allocation9 + $0x28] sm:$0xff]
      %v380 = vld [vmem:[#allocation9 + $0x30] sm:$0xff]
      %v381 = vld [vmem:[#allocation9 + $0x38] sm:$0xff]
      %v382 = vld [vmem:[#allocation9 + $0x40] sm:$0xff]
      %v383 = vld [vmem:[#allocation9 + $0x48] sm:$0xff]
      %v384 = vld [vmem:[#allocation9 + $0x50] sm:$0xff]
      %v385 = vld [vmem:[#allocation9 + $0x58] sm:$0xff]
      %v386 = vld [vmem:[#allocation9 + $0x60] sm:$0xff]
      %v387 = vld [vmem:[#allocation9 + $0x68] sm:$0xff]
      %v388 = vld [vmem:[#allocation9 + $0x70] sm:$0xff]
      %v389 = vld [vmem:[#allocation9 + $0x78] sm:$0xff]
      %v390 = vld [vmem:[%s5] sm:$0x1]
      %v392 = vlaneseq
      %v393 = vshrl.u32 %v392, 7
      %v394 = vsub.s32 0, %v393
      %v395 = vrot.slane %v390, %v394
      %397 = vmatprep.subr.mxu0 0.0
      %398 = vmatpush1.msra.mxu0 %v389
      %399 = vmatprep.subr.mxu0 0.0
      %400 = vmatpush1.msra.mxu0 %v388
      %401 = vmatprep.subr.mxu0 0.0
      %402 = vmatpush1.msra.mxu0 %v387
      %403 = vmatprep.subr.mxu0 0.0
      %404 = vmatpush1.msra.mxu0 %v386
      %405 = vmatprep.subr.mxu0 0.0
      %406 = vmatpush1.msra.mxu0 %v385
      %407 = vmatprep.subr.mxu0 0.0
      %408 = vmatpush1.msra.mxu0 %v384
      %409 = vmatprep.subr.mxu0 0.0
      %410 = vmatpush1.msra.mxu0 %v383
      %411 = vmatprep.subr.mxu0 0.0
      %412 = vmatpush1.msra.mxu0 %v382
      %413 = vmatprep.subr.mxu0 0.0
      %414 = vmatpush1.msra.mxu0 %v381
      %415 = vmatprep.subr.mxu0 0.0
      %416 = vmatpush1.msra.mxu0 %v380
      %417 = vmatprep.subr.mxu0 0.0
      %418 = vmatpush1.msra.mxu0 %v379
      %419 = vmatprep.subr.mxu0 0.0
      %420 = vmatpush1.msra.mxu0 %v378
      %421 = vmatprep.subr.mxu0 0.0
      %422 = vmatpush1.msra.mxu0 %v377
      %423 = vmatprep.subr.mxu0 0.0
      %424 = vmatpush1.msra.mxu0 %v376
      %425 = vmatprep.subr.mxu0 0.0
      %426 = vmatpush1.msra.mxu0 %v375
      %427 = vmatprep.subr.mxu0 0.0
      %428 = vmatpush1.msra.mxu0 %v374
      %429 = vmatprep.subr.mxu0 0.0
      %430 = vmatpush2.msra.mxu0 0.0
      %431 = vmatprep.subr.mxu0 0.0
      %432 = vmatpush2.msra.mxu0 0.0
      %433 = vmatprep.subr.mxu0 0.0
      %434 = vmatpush2.msra.mxu0 0.0
      %435 = vmatprep.subr.mxu0 0.0
      %436 = vmatpush2.msra.mxu0 0.0
      %437 = vmatprep.subr.mxu0 0.0
      %438 = vmatpush2.msra.mxu0 0.0
      %439 = vmatprep.subr.mxu0 0.0
      %440 = vmatpush2.msra.mxu0 0.0
      %441 = vmatprep.subr.mxu0 0.0
      %442 = vmatpush2.msra.mxu0 0.0
      %443 = vmatprep.subr.mxu0 0.0
      %444 = vmatpush2.msra.mxu0 0.0
      %445 = vmatprep.subr.mxu0 0.0
      %446 = vmatpush2.msra.mxu0 0.0
      %447 = vmatprep.subr.mxu0 0.0
      %448 = vmatpush2.msra.mxu0 0.0
      %449 = vmatprep.subr.mxu0 0.0
      %450 = vmatpush2.msra.mxu0 0.0
      %451 = vmatprep.subr.mxu0 0.0
      %452 = vmatpush2.msra.mxu0 0.0
      %453 = vmatprep.subr.mxu0 0.0
      %454 = vmatpush2.msra.mxu0 0.0
      %455 = vmatprep.subr.mxu0 0.0
      %456 = vmatpush2.msra.mxu0 0.0
      %457 = vmatprep.subr.mxu0 0.0
      %458 = vmatpush2.msra.mxu0 0.0
      %459 = vmatprep.subr.mxu0 0.0
      %460 = vmatpush2.msra.mxu0 0.0
      %461 = vmatprep.mubr.f32.mxu0 0.0
      %462 = vmatmul.mubr.f32.gmra.mxu0 %v373
      %v463 = vpop.f32.mrf.mxu0
      %v464 = vadd.f32 %v395, %v463
      %v465 = vpop.f32.mrf.mxu0
      %466 = vdwg.mxu0
      %467 = vst [vmem:[#allocation10] sm:$0xff] %v464
    $region45: #{tpu_custom_call.1} parent=1 // pred_fallthru
      _
    // Predicated region
    $region46: #{tpu_custom_call.1} parent=1 // pred_check
      _
    $region47: #{tpu_custom_call.1} parent=1 // pred_check_branch
      %469 = sbr.rel (0) target = $region49
    $region48: #{tpu_custom_call.1} parent=1 // pred_region
      %s471 = ssub.s32 128, 128
      %472 = vsyncadd [#allocation6], %s471
      %s474 = sshll.u32 [#allocation10], 4
      %s475 = int_to_ptr.vmem [resolvable:$true] %s474
      %477 = dma.vmem_to_hbm [thread:$0]  %s475, 128, %s6, [#allocation6]
    $region49: #{tpu_custom_call.1} parent=1 // pred_fallthru
      _
    // Predicated region
    $region50: #{tpu_custom_call.1} parent=1 // pred_check
      _
    $region51: #{tpu_custom_call.1} parent=1 // pred_check_branch
      %479 = sbr.rel (0) target = $region53
    $region52: #{tpu_custom_call.1} parent=1 // pred_region
      %480 = dma.done [#allocation6], 128
    $region53: #{tpu_custom_call.1} parent=1 // pred_fallthru
      _
    %481 = vsyncpa [#allocation5], 1
    %482 = vsyncpa [#allocation8], 1
    %483 = vsyncpa [#allocation6], 1

</llo_original>
